<compile_context>
chip_gen: v5e
topology: v5e:2x2
jax: 0.10.0
libtpu: 0.0.40
codegen_flags: <defaults>
</compile_context>

<pallas_src>
import jax
import jax.numpy as jnp
from jax.experimental import pallas as pl
from jax.experimental.pallas import tpu as pltpu


# ----------------------------- kernel body -------------------------------- #

def _make_gcn_layer_kernel(with_residual: bool, xw_resident: bool, tk: int):
    """out = relu(dinv_i * (A_hat_int8 @ XW_scaled) + b [+ residual])."""

    def kernel(adj_ref, xw_ref, dinv_ref, b_ref, *rest):
        if with_residual:
            res_ref, out_ref, acc_ref = rest
        else:
            out_ref, acc_ref = rest

        k = pl.program_id(1)

        @pl.when(k == 0)
        def _init():
            acc_ref[...] = jnp.zeros_like(acc_ref)

        if xw_resident:
            # XW lives fully in VMEM (grid-invariant block); slice the k-tile here.
            off = pl.multiple_of(k * tk, tk)
            xw = xw_ref[pl.ds(off, tk), :]
        else:
            xw = xw_ref[...]

        # int8 counts -> bf16 right before the MXU.  The per-tile VPU cast hides
        # under the adjacency DMA, which is the binding resource (mem-bound kernel).
        adj = adj_ref[...].astype(jnp.bfloat16)
        acc_ref[...] += jnp.dot(adj, xw, preferred_element_type=jnp.float32)

        @pl.when(k == pl.num_programs(1) - 1)
        def _finalize():
            out = acc_ref[...] * dinv_ref[...] + b_ref[...]   # row norm + bias, f32
            if with_residual:
                out = out + res_ref[...]                      # f32 residual
            out_ref[...] = jnp.maximum(out, 0.0).astype(out_ref.dtype)

    return kernel


# ----------------------------- layer wrapper ------------------------------ #

def _gcn_layer(counts_i8, xw_bf16, dinv_col, bias_row, residual, out_dtype,
               tm, tk, xw_resident):
    n_pad = counts_i8.shape[0]
    f_out = xw_bf16.shape[1]
    grid = (n_pad // tm, n_pad // tk)

    # Adjacency tile streams through the default double-buffered pipeline.
    adj_spec = pl.BlockSpec((tm, tk), lambda i, k: (i, k))

    if xw_resident:
        # DMA'd once per layer (block index never changes).
        xw_spec = pl.BlockSpec((n_pad, f_out), lambda i, k: (0, 0))
    else:
        xw_spec = pl.BlockSpec((tk, f_out), lambda i, k: (k, 0))

    in_specs = [
        adj_spec,                                        # A_hat counts tile (int8)
        xw_spec,                                         # XW (bf16, dinv_j-scaled)
        pl.BlockSpec((tm, 1), lambda i, k: (i, 0)),      # dinv_i (row scaling)
        pl.BlockSpec((1, f_out), lambda i, k: (0, 0)),   # bias (grid-invariant)
    ]
    operands = [counts_i8, xw_bf16, dinv_col, bias_row]
    if residual is not None:
        in_specs.append(pl.BlockSpec((tm, f_out), lambda i, k: (i, 0)))
        operands.append(residual)

    return pl.pallas_call(
        _make_gcn_layer_kernel(residual is not None, xw_resident, tk),
        out_shape=jax.ShapeDtypeStruct((n_pad, f_out), out_dtype),
        grid_spec=pltpu.PrefetchScalarGridSpec(
            num_scalar_prefetch=0,
            grid=grid,
            in_specs=in_specs,
            out_specs=pl.BlockSpec((tm, f_out), lambda i, k: (i, 0)),
            scratch_shapes=[pltpu.VMEM((tm, f_out), jnp.float32)],
        ),
        compiler_params=pltpu.CompilerParams(
            # i axis parallel (megacore on v7x); k must stay arbitrary (accumulator).
            dimension_semantics=("parallel", "arbitrary"),
            # Worst-case footprint here is ~20 MiB; 48 MiB is safe on v5e/v6e/v7x.
            vmem_limit_bytes=48 * 1024 * 1024,
        ),
    )(*operands)


# ----------------------------- public wrapper ------------------------------ #

def _round_up(v, m):
    return ((v + m - 1) // m) * m


def _pad2(a, rows, cols):
    return jnp.pad(a, ((0, rows - a.shape[0]), (0, cols - a.shape[1])))


def _choose_tile(n):
    """Pick a square tile (tm=tk) and padded node count.

    Small cost model: int8 adjacency DMA (~n_pad^2 bytes) vs ~0.35us per grid step.
    Decouples padding waste from tile size without inflating N^2 work.
    """
    best = None
    for t in (1024, 512, 256, 128):
        n_pad = _round_up(max(n, t), t)
        steps = (n_pad // t) ** 2
        cost = n_pad * n_pad / 1.0e6 + 0.35 * steps
        if best is None or cost < best[0]:
            best = (cost, t, n_pad)
    _, t, n_pad = best
    return t, n_pad


def res_gcn_conv(x, edge_index, w1, b1, w2, b2):
    """x: [N, F] float32, edge_index: [2, E] int32 (row 0 = src, row 1 = dst)."""
    N, F = x.shape
    H = w1.shape[1]
    assert w2.shape == (H, F), "out_dim must equal in_dim for the residual add"

    tm, n_pad = _choose_tile(N)
    tk = tm
    fp = _round_up(F, 128)
    hp = _round_up(H, 128)

    # ---- glue (plain JAX): exact integer adjacency counts, PyG gcn_norm semantics ----
    src = edge_index[0].astype(jnp.int32)
    dst = edge_index[1].astype(jnp.int32)
    diag = jnp.arange(N, dtype=jnp.int32)

    counts32 = jnp.zeros((N, N), jnp.int32).at[dst, src].add(1)      # duplicates sum
    self_cnt = jnp.zeros((N,), jnp.int32).at[dst].add((src == dst).astype(jnp.int32))
    add_loop = (self_cnt == 0).astype(jnp.int32)                     # add_remaining_self_loops
    counts32 = counts32.at[diag, diag].add(add_loop)
    # Single padded int8 copy is the only N^2 staging array kept for the kernels.
    counts = jnp.zeros((n_pad, n_pad), jnp.int8).at[:N, :N].set(counts32.astype(jnp.int8))

    deg = jnp.zeros((N,), jnp.float32).at[dst].add(1.0) + add_loop.astype(jnp.float32)
    dinv = 1.0 / jnp.sqrt(deg)                                       # deg >= 1 always
    dinv_col = jnp.zeros((n_pad, 1), jnp.float32).at[:N, 0].set(dinv)

    # Padded f32 inputs / params (feature dims lane-dense -> unmasked stores).
    x_p = _pad2(x.astype(jnp.float32), n_pad, fp)
    w1_p = _pad2(w1.astype(jnp.float32), fp, hp)
    w2_p = _pad2(w2.astype(jnp.float32), hp, fp)
    b1_p = _pad2(b1.reshape(1, H).astype(jnp.float32), 1, hp)
    b2_p = _pad2(b2.reshape(1, F).astype(jnp.float32), 1, fp)

    # Keep XW fully VMEM-resident when it is small (conservative budget incl. 2 buffers).
    xw_resident = n_pad * max(hp, fp) * 2 <= 8 * 1024 * 1024

    # Layer 1: h = relu(dinv_i * (A_hat @ (dinv_j * (x @ W1))) + b1)
    xw1 = ((x_p @ w1_p) * dinv_col).astype(jnp.bfloat16)
    h = _gcn_layer(counts, xw1, dinv_col, b1_p, residual=None,
                   out_dtype=jnp.float32, tm=tm, tk=tk, xw_resident=xw_resident)

    # Layer 2: out = relu(dinv_i * (A_hat @ (dinv_j * (h @ W2))) + b2 + x)
    xw2 = ((h @ w2_p) * dinv_col).astype(jnp.bfloat16)
    out = _gcn_layer(counts, xw2, dinv_col, b2_p, residual=x_p,
                     out_dtype=jnp.float32, tm=tm, tk=tk, xw_resident=xw_resident)
    return out[:N, :F]


# ----------------------------- pure-JAX reference -------------------------- #

def _reference(x, edge_index, w1, b1, w2, b2):
    N = x.shape[0]
    src, dst = edge_index[0], edge_index[1]
    adj = jnp.zeros((N, N), jnp.float32).at[dst, src].add(1.0)
    has_loop = jnp.diag(adj) > 0
    adj = adj + jnp.diag(jnp.where(has_loop, 0.0, 1.0))   # add_remaining_self_loops
    deg = adj.sum(1)
    dinv = 1.0 / jnp.sqrt(deg)
    nadj = adj * dinv[:, None] * dinv[None, :]
    h = jax.nn.relu(nadj @ (x @ w1) + b1)
    out = nadj @ (h @ w2) + b2
    return jax.nn.relu(out + x)


def _check(out, ref, tag):
    rel = jnp.linalg.norm(out - ref) / (jnp.linalg.norm(ref) + 1e-8)
    assert out.shape == ref.shape, f"{tag}: shape mismatch"
    assert float(rel) < 2e-2, f"{tag}: relative error {float(rel):.4e} too large"


if __name__ == "__main__":
    key = jax.random.PRNGKey(0)

    # ---- test 1: small deterministic ring graph (N=16, in=out=32, hidden=64) ----
    N, IN_DIM, HIDDEN, OUT_DIM = 16, 32, 64, 32
    kx, kw1, kw2, kb1, kb2, k2 = jax.random.split(key, 6)

    x = jax.random.normal(kx, (N, IN_DIM), jnp.float32)
    idx = jnp.arange(N, dtype=jnp.int32)
    nxt = (idx + 1) % N
    edge_index = jnp.stack(
        [jnp.concatenate([idx, nxt]), jnp.concatenate([nxt, idx])], axis=0
    )  # [2, 2N]

    w1 = jax.random.normal(kw1, (IN_DIM, HIDDEN), jnp.float32) * (2.0 / (IN_DIM + HIDDEN)) ** 0.5
    b1 = 0.1 * jax.random.normal(kb1, (HIDDEN,), jnp.float32)
    w2 = jax.random.normal(kw2, (HIDDEN, OUT_DIM), jnp.float32) * (2.0 / (HIDDEN + OUT_DIM)) ** 0.5
    b2 = 0.1 * jax.random.normal(kb2, (OUT_DIM,), jnp.float32)

    out = jax.block_until_ready(res_gcn_conv(x, edge_index, w1, b1, w2, b2))
    _check(out, _reference(x, edge_index, w1, b1, w2, b2), "ring16")

    # ---- test 2: larger random graph exercising padding + tile selection ----
    N2, F2, H2 = 300, 48, 96
    ka, kb, kc, kd, ke, kf = jax.random.split(k2, 6)
    x2 = jax.random.normal(ka, (N2, F2), jnp.float32)
    E2 = 4 * N2
    src2 = jax.random.randint(kb, (E2,), 0, N2, jnp.int32)
    dst2 = jax.random.randint(kc, (E2,), 0, N2, jnp.int32)
    edge_index2 = jnp.stack([src2, dst2], axis=0)
    w1b = jax.random.normal(kd, (F2, H2), jnp.float32) * (2.0 / (F2 + H2)) ** 0.5
    b1b = 0.1 * jax.random.normal(ke, (H2,), jnp.float32)
    w2b = jax.random.normal(kf, (H2, F2), jnp.float32) * (2.0 / (H2 + F2)) ** 0.5
    b2b = jnp.zeros((F2,), jnp.float32)

    out2 = jax.block_until_ready(res_gcn_conv(x2, edge_index2, w1b, b1b, w2b, b2b))
    _check(out2, _reference(x2, edge_index2, w1b, b1b, w2b, b2b), "rand300")

    print("KERNEL_OK")
</pallas_src>

<mosaic_0001>
module attributes {stable_mosaic.version = 11 : i64} {
  func.func @kernel(%arg0: i32, %arg1: i32, %arg2: memref<128x128xi8, #tpu.memory_space<vmem>>, %arg3: memref<128x128xbf16, #tpu.memory_space<vmem>>, %arg4: memref<128x1xf32, #tpu.memory_space<vmem>>, %arg5: memref<1x128xf32, #tpu.memory_space<vmem>>, %arg6: memref<128x128xf32, #tpu.memory_space<vmem>>, %arg7: memref<128x128xf32, #tpu.memory_space<vmem>>) attributes {dimension_semantics = [#tpu.dimension_semantics<parallel>, #tpu.dimension_semantics<arbitrary>], iteration_bounds = array<i64: 1, 1>, scalar_prefetch = 0 : i64, scratch_operands = 1 : i64, tpu.core_type = #tpu.core_type<tc>, window_params = [{transform_indices = @transform_0, window_bounds = array<i64: 128, 128>}, {pipeline_mode = #tpu.pipeline_mode<synchronous>, transform_indices = @transform_1, window_bounds = array<i64: 128, 128>}, {transform_indices = @transform_2, window_bounds = array<i64: 128, 1>}, {pipeline_mode = #tpu.pipeline_mode<synchronous>, transform_indices = @transform_3, window_bounds = array<i64: 1, 128>}, {transform_indices = @transform_4, window_bounds = array<i64: 128, 128>}]} {
    %c0_i32 = arith.constant 0 : i32
    %0 = arith.cmpi eq, %arg1, %c0_i32 : i32
    %1 = arith.extui %0 : i1 to i32
    %c0_i32_0 = arith.constant 0 : i32
    %2 = arith.cmpi ne, %1, %c0_i32_0 : i32
    scf.if %2 {
      %cst_9 = arith.constant 0.000000e+00 : f32
      %16 = vector.broadcast %cst_9 : f32 to vector<128x128xf32>
      %c0_10 = arith.constant 0 : index
      %c0_11 = arith.constant 0 : index
      %17 = vector.load %arg7[%c0_10, %c0_11] : memref<128x128xf32, #tpu.memory_space<vmem>>, vector<128x128xf32>
      tpu.vector_store %arg7[%c0_10, %c0_11], %16 {strides = array<i32>} : memref<128x128xf32, #tpu.memory_space<vmem>>, vector<128x128xf32>,
    } else {
    }
    %c128_i32 = arith.constant 128 : i32
    %3 = arith.muli %arg1, %c128_i32 : i32
    %4 = tpu.assume_multiple %3, 128 : i32
    %5 = arith.index_cast %4 : i32 to index
    %c0 = arith.constant 0 : index
    %6 = vector.load %arg3[%5, %c0] : memref<128x128xbf16, #tpu.memory_space<vmem>>, vector<128x128xbf16>
    %c0_1 = arith.constant 0 : index
    %c0_2 = arith.constant 0 : index
    %7 = vector.load %arg2[%c0_1, %c0_2] : memref<128x128xi8, #tpu.memory_space<vmem>>, vector<128x128xi8>
    %8 = arith.sitofp %7 : vector<128x128xi8> to vector<128x128xbf16>
    %c0_3 = arith.constant 0 : index
    %c0_4 = arith.constant 0 : index
    %9 = vector.load %arg7[%c0_3, %c0_4] : memref<128x128xf32, #tpu.memory_space<vmem>>, vector<128x128xf32>
    %cst = arith.constant dense<0.000000e+00> : vector<128x128xf32>
    %10 = tpu.matmul %8, %6, %cst {dimension_numbers = #tpu.dot_dimension_numbers<[1], [0], [0], [1], [0, 0, 1, 1], [], []>} : vector<128x128xbf16>, vector<128x128xbf16>, vector<128x128xf32> -> vector<128x128xf32>
    %11 = arith.addf %9, %10 : vector<128x128xf32>
    %c0_5 = arith.constant 0 : index
    %c0_6 = arith.constant 0 : index
    %12 = vector.load %arg7[%c0_5, %c0_6] : memref<128x128xf32, #tpu.memory_space<vmem>>, vector<128x128xf32>
    tpu.vector_store %arg7[%c0_5, %c0_6], %11 {strides = array<i32>} : memref<128x128xf32, #tpu.memory_space<vmem>>, vector<128x128xf32>,
    %c0_i32_7 = arith.constant 0 : i32
    %13 = arith.cmpi eq, %arg1, %c0_i32_7 : i32
    %14 = arith.extui %13 : i1 to i32
    %c0_i32_8 = arith.constant 0 : i32
    %15 = arith.cmpi ne, %14, %c0_i32_8 : i32
    scf.if %15 {
      %c0_9 = arith.constant 0 : index
      %c0_10 = arith.constant 0 : index
      %16 = vector.load %arg7[%c0_9, %c0_10] : memref<128x128xf32, #tpu.memory_space<vmem>>, vector<128x128xf32>
      %c0_11 = arith.constant 0 : index
      %c0_12 = arith.constant 0 : index
      %17 = vector.load %arg4[%c0_11, %c0_12] : memref<128x1xf32, #tpu.memory_space<vmem>>, vector<128x1xf32>
      %18 = vector.broadcast %17 : vector<128x1xf32> to vector<128x128xf32>
      %19 = arith.mulf %16, %18 : vector<128x128xf32>
      %c0_13 = arith.constant 0 : index
      %c0_14 = arith.constant 0 : index
      %20 = vector.load %arg5[%c0_13, %c0_14] : memref<1x128xf32, #tpu.memory_space<vmem>>, vector<1x128xf32>
      %21 = vector.broadcast %20 : vector<1x128xf32> to vector<128x128xf32>
      %22 = arith.addf %19, %21 : vector<128x128xf32>
      %cst_15 = arith.constant 0.000000e+00 : f32
      %23 = vector.broadcast %cst_15 : f32 to vector<128x128xf32>
      %24 = arith.maximumf %22, %23 : vector<128x128xf32>
      %c0_16 = arith.constant 0 : index
      %c0_17 = arith.constant 0 : index
      %25 = vector.load %arg6[%c0_16, %c0_17] : memref<128x128xf32, #tpu.memory_space<vmem>>, vector<128x128xf32>
      tpu.vector_store %arg6[%c0_16, %c0_17], %24 {strides = array<i32>} : memref<128x128xf32, #tpu.memory_space<vmem>>, vector<128x128xf32>,
    } else {
    }
    return
  }
  func.func @transform_0(%arg0: i32, %arg1: i32) -> (i32, i32) {
    %c0_i32 = arith.constant 0 : i32
    return %arg0, %arg1 : i32, i32
  }
  func.func @transform_1(%arg0: i32, %arg1: i32) -> (i32, i32) {
    %c0_i32 = arith.constant 0 : i32
    %c0_i32_0 = arith.constant 0 : i32
    %c0_i32_1 = arith.constant 0 : i32
    return %c0_i32, %c0_i32_0 : i32, i32
  }
  func.func @transform_2(%arg0: i32, %arg1: i32) -> (i32, i32) {
    %c0_i32 = arith.constant 0 : i32
    %c0_i32_0 = arith.constant 0 : i32
    return %arg0, %c0_i32 : i32, i32
  }
  func.func @transform_3(%arg0: i32, %arg1: i32) -> (i32, i32) {
    %c0_i32 = arith.constant 0 : i32
    %c0_i32_0 = arith.constant 0 : i32
    %c0_i32_1 = arith.constant 0 : i32
    return %c0_i32, %c0_i32_0 : i32, i32
  }
  func.func @transform_4(%arg0: i32, %arg1: i32) -> (i32, i32) {
    %c0_i32 = arith.constant 0 : i32
    %c0_i32_0 = arith.constant 0 : i32
    return %arg0, %c0_i32 : i32, i32
  }
}

</mosaic_0001>

<llo_original>
// kernel: tpu_custom_call.1
$region0: #{tpu_custom_call.1}
  #allocation0 [shape = 'u32[]', space=smem, size = 0x4, offset = 0x4, fixed_abs, tag = 'smem constant byte address 0x4 - core index']
  #allocation1 [shape = 'u32[72,128]{1,0:T(1,128)}', space=vmem, size = 0x9000, scoped, tag = 'internal scratch']
  #allocation2 [shape = 'f32[128,128]{1,0:T(8,128)}', space=vmem, size = 0x10000, scoped, tag = 'scratch operand']
  %s0 = inlined_call_operand.vmem [shape: s8[128,128], index: 0, kind: input, shape index: {}]
  %s1 = inlined_call_operand.vmem [shape: bf16[128,128], index: 1, kind: input, shape index: {}]
  %s2 = inlined_call_operand.vmem [shape: f32[128,1], index: 2, kind: input, shape index: {}]
  %s3 = inlined_call_operand.vmem [shape: f32[1,128], index: 3, kind: input, shape index: {}]
  %s4 = inlined_call_operand.hbm [shape: f32[128,128], index: 4, kind: output, shape index: {}]
  %s5 = sld [smem:[#allocation0]]
  $region34: #{tpu_custom_call.1} parent=0
    _
  %s7 = ssub.s32 1, %s5
  %s8 = scalar_select 0, %s7, %s5
  $region1: #{tpu_custom_call.1} parent=0
    #allocation3 [shape = 'u8[65536]{0}', space=vmem, size = 0x10000, scoped, tag = 'output window, operand 0, single buffered']
    #allocation4 [shape = 's32[1]{0}', space=sflag, size = 0x4, scoped, tag = 'scoped memory for tpu_custom_call.1']
    %9 = vsyncpa [#allocation4], 0
    // Predicated region
    $region2: #{tpu_custom_call.1} parent=1 // pred_check
      _
    $region3: #{tpu_custom_call.1} parent=1 // pred_check_branch
      %11 = sbr.rel (0) target = $region5
    $region4: #{tpu_custom_call.1} parent=1 // pred_region
      _
    $region5: #{tpu_custom_call.1} parent=1 // pred_fallthru
      _
    // Predicated region
    $region6: #{tpu_custom_call.1} parent=1 // pred_check
      _
    $region7: #{tpu_custom_call.1} parent=1 // pred_check_branch
      %13 = sbr.rel (0) target = $region9
    $region8: #{tpu_custom_call.1} parent=1 // pred_region
      _
    $region9: #{tpu_custom_call.1} parent=1 // pred_fallthru
      _
    // Predicated region
    $region10: #{tpu_custom_call.1} parent=1 // pred_check
      _
    $region11: #{tpu_custom_call.1} parent=1 // pred_check_branch
      %15 = sbr.rel (0) target = $region13
    $region12: #{tpu_custom_call.1} parent=1 // pred_region
      _
    $region13: #{tpu_custom_call.1} parent=1 // pred_fallthru
      _
    // Predicated region
    $region14: #{tpu_custom_call.1} parent=1 // pred_check
      _
    $region15: #{tpu_custom_call.1} parent=1 // pred_check_branch
      %17 = sbr.rel (0) target = $region17
    $region16: #{tpu_custom_call.1} parent=1 // pred_region
      _
    $region17: #{tpu_custom_call.1} parent=1 // pred_fallthru
      _
    %p18 = scmp.eq.s32.totalorder 0, 0
    // Predicated region
    $region18: #{tpu_custom_call.1} parent=1 // pred_check
      %p19 = pneg %p18
    $region19: #{tpu_custom_call.1} parent=1 // pred_check_branch
      %21 = sbr.rel (%p19) target = $region21
    $region20: #{tpu_custom_call.1} parent=1 // pred_region
      %22 = vst [vmem:[#allocation2] sm:$0xff] 0.0
      %23 = vst [vmem:[#allocation2 + $0x8] sm:$0xff] 0.0
      %24 = vst [vmem:[#allocation2 + $0x10] sm:$0xff] 0.0
      %25 = vst [vmem:[#allocation2 + $0x18] sm:$0xff] 0.0
      %26 = vst [vmem:[#allocation2 + $0x20] sm:$0xff] 0.0
      %27 = vst [vmem:[#allocation2 + $0x28] sm:$0xff] 0.0
      %28 = vst [vmem:[#allocation2 + $0x30] sm:$0xff] 0.0
      %29 = vst [vmem:[#allocation2 + $0x38] sm:$0xff] 0.0
      %30 = vst [vmem:[#allocation2 + $0x40] sm:$0xff] 0.0
      %31 = vst [vmem:[#allocation2 + $0x48] sm:$0xff] 0.0
      %32 = vst [vmem:[#allocation2 + $0x50] sm:$0xff] 0.0
      %33 = vst [vmem:[#allocation2 + $0x58] sm:$0xff] 0.0
      %34 = vst [vmem:[#allocation2 + $0x60] sm:$0xff] 0.0
      %35 = vst [vmem:[#allocation2 + $0x68] sm:$0xff] 0.0
      %36 = vst [vmem:[#allocation2 + $0x70] sm:$0xff] 0.0
      %37 = vst [vmem:[#allocation2 + $0x78] sm:$0xff] 0.0
    $region21: #{tpu_custom_call.1} parent=1 // pred_fallthru
      _
    %s38 = smul.u32 0, 128
    %s39 = sshra.s32 %s38, 3
    %s40 = sand.u32 %s38, 7
    %s41 = smul.addr %s39, 4
    %s42 = scalar_lea.vmem %s1, %s41
    %v43 = vld [vmem:[%s42] sm:$0xf]
    %v44 = vld [vmem:[%s42 + $0x4] sm:$0xf]
    %v45 = vld [vmem:[%s42 + $0x8] sm:$0xf]
    %v46 = vld [vmem:[%s42 + $0xc] sm:$0xf]
    %v47 = vld [vmem:[%s42 + $0x10] sm:$0xf]
    %v48 = vld [vmem:[%s42 + $0x14] sm:$0xf]
    %v49 = vld [vmem:[%s42 + $0x18] sm:$0xf]
    %v50 = vld [vmem:[%s42 + $0x1c] sm:$0xf]
    %v51 = vld [vmem:[%s42 + $0x20] sm:$0xf]
    %v52 = vld [vmem:[%s42 + $0x24] sm:$0xf]
    %v53 = vld [vmem:[%s42 + $0x28] sm:$0xf]
    %v54 = vld [vmem:[%s42 + $0x2c] sm:$0xf]
    %v55 = vld [vmem:[%s42 + $0x30] sm:$0xf]
    %v56 = vld [vmem:[%s42 + $0x34] sm:$0xf]
    %v57 = vld [vmem:[%s42 + $0x38] sm:$0xf]
    %v58 = vld [vmem:[%s42 + $0x3c] sm:$0xf]
    %v59 = vld [vmem:[%s0] sm:$0xff]
    %v60 = vld [vmem:[%s0 + $0x8] sm:$0xff]
    %v61 = vld [vmem:[%s0 + $0x10] sm:$0xff]
    %v62 = vld [vmem:[%s0 + $0x18] sm:$0xff]
    %v63 = vunpack.c.0.s8 %v59
    %v64 = vunpack.c.1.s8 %v59
    %v65 = vunpack.c.2.s8 %v59
    %v66 = vunpack.c.3.s8 %v59
    %v67 = vunpack.c.0.s8 %v60
    %v68 = vunpack.c.1.s8 %v60
    %v69 = vunpack.c.2.s8 %v60
    %v70 = vunpack.c.3.s8 %v60
    %v71 = vunpack.c.0.s8 %v61
    %v72 = vunpack.c.1.s8 %v61
    %v73 = vunpack.c.2.s8 %v61
    %v74 = vunpack.c.3.s8 %v61
    %v75 = vunpack.c.0.s8 %v62
    %v76 = vunpack.c.1.s8 %v62
    %v77 = vunpack.c.2.s8 %v62
    %v78 = vunpack.c.3.s8 %v62
    %v79 = vcvt.s32.f32 %v63
    %v80 = vcvt.s32.f32 %v64
    %v81 = vcvt.s32.f32 %v65
    %v82 = vcvt.s32.f32 %v66
    %v83 = vcvt.s32.f32 %v67
    %v84 = vcvt.s32.f32 %v68
    %v85 = vcvt.s32.f32 %v69
    %v86 = vcvt.s32.f32 %v70
    %v87 = vcvt.s32.f32 %v71
    %v88 = vcvt.s32.f32 %v72
    %v89 = vcvt.s32.f32 %v73
    %v90 = vcvt.s32.f32 %v74
    %v91 = vcvt.s32.f32 %v75
    %v92 = vcvt.s32.f32 %v76
    %v93 = vcvt.s32.f32 %v77
    %v94 = vcvt.s32.f32 %v78
    %v95 = vpack.c.bf16 %v80, %v79
    %v96 = vpack.c.bf16 %v82, %v81
    %v97 = vpack.c.bf16 %v84, %v83
    %v98 = vpack.c.bf16 %v86, %v85
    %v99 = vpack.c.bf16 %v88, %v87
    %v100 = vpack.c.bf16 %v90, %v89
    %v101 = vpack.c.bf16 %v92, %v91
    %v102 = vpack.c.bf16 %v94, %v93
    %v103 = vld [vmem:[#allocation2] sm:$0xff]
    %v104 = vld [vmem:[#allocation2 + $0x8] sm:$0xff]
    %v105 = vld [vmem:[#allocation2 + $0x10] sm:$0xff]
    %v106 = vld [vmem:[#allocation2 + $0x18] sm:$0xff]
    %v107 = vld [vmem:[#allocation2 + $0x20] sm:$0xff]
    %v108 = vld [vmem:[#allocation2 + $0x28] sm:$0xff]
    %v109 = vld [vmem:[#allocation2 + $0x30] sm:$0xff]
    %v110 = vld [vmem:[#allocation2 + $0x38] sm:$0xff]
    %v111 = vld [vmem:[#allocation2 + $0x40] sm:$0xff]
    %v112 = vld [vmem:[#allocation2 + $0x48] sm:$0xff]
    %v113 = vld [vmem:[#allocation2 + $0x50] sm:$0xff]
    %v114 = vld [vmem:[#allocation2 + $0x58] sm:$0xff]
    %v115 = vld [vmem:[#allocation2 + $0x60] sm:$0xff]
    %v116 = vld [vmem:[#allocation2 + $0x68] sm:$0xff]
    %v117 = vld [vmem:[#allocation2 + $0x70] sm:$0xff]
    %v118 = vld [vmem:[#allocation2 + $0x78] sm:$0xff]
    %v135 = vunpack.c.l.b16 %v43
    %v136 = vunpack.c.l.b16 %v44
    %v137 = vunpack.c.l.b16 %v45
    %v138 = vunpack.c.l.b16 %v46
    %v139 = vunpack.c.l.b16 %v47
    %v140 = vunpack.c.l.b16 %v48
    %v141 = vunpack.c.l.b16 %v49
    %v142 = vunpack.c.l.b16 %v50
    %v143 = vunpack.c.l.b16 %v51
    %v144 = vunpack.c.l.b16 %v52
    %v145 = vunpack.c.l.b16 %v53
    %v146 = vunpack.c.l.b16 %v54
    %v147 = vunpack.c.l.b16 %v55
    %v148 = vunpack.c.l.b16 %v56
    %v149 = vunpack.c.l.b16 %v57
    %v150 = vunpack.c.l.b16 %v58
    %v151 = vpack.c.b16 %v136, %v135
    %v152 = vpack.c.b16 %v138, %v137
    %v153 = vpack.c.b16 %v140, %v139
    %v154 = vpack.c.b16 %v142, %v141
    %v155 = vpack.c.b16 %v144, %v143
    %v156 = vpack.c.b16 %v146, %v145
    %v157 = vpack.c.b16 %v148, %v147
    %v158 = vpack.c.b16 %v150, %v149
    %167 = vmatpush.bf16.msra.mxu0 %v158
    %168 = vmatpush.bf16.msra.mxu0 %v157
    %169 = vmatpush.bf16.msra.mxu0 %v156
    %170 = vmatpush.bf16.msra.mxu0 %v155
    %171 = vmatpush.bf16.msra.mxu0 %v154
    %172 = vmatpush.bf16.msra.mxu0 %v153
    %173 = vmatpush.bf16.msra.mxu0 %v152
    %174 = vmatpush.bf16.msra.mxu0 %v151
    %175 = vmatmul.bf16.gmra.mxu0 %v95
    %v176 = vpop.f32.mrf.mxu0
    %v177 = vadd.f32 0.0, %v176
    %v178 = vpop.f32.mrf.mxu0
    %v179 = vadd.f32 0.0, %v178
    %180 = vmatmul.bf16.gmra.mxu0 %v96
    %v181 = vpop.f32.mrf.mxu0
    %v182 = vadd.f32 0.0, %v181
    %v183 = vpop.f32.mrf.mxu0
    %v184 = vadd.f32 0.0, %v183
    %185 = vmatmul.bf16.gmra.mxu0 %v97
    %v186 = vpop.f32.mrf.mxu0
    %v187 = vadd.f32 0.0, %v186
    %v188 = vpop.f32.mrf.mxu0
    %v189 = vadd.f32 0.0, %v188
    %190 = vmatmul.bf16.gmra.mxu0 %v98
    %v191 = vpop.f32.mrf.mxu0
    %v192 = vadd.f32 0.0, %v191
    %v193 = vpop.f32.mrf.mxu0
    %v194 = vadd.f32 0.0, %v193
    %195 = vmatmul.bf16.gmra.mxu0 %v99
    %v196 = vpop.f32.mrf.mxu0
    %v197 = vadd.f32 0.0, %v196
    %v198 = vpop.f32.mrf.mxu0
    %v199 = vadd.f32 0.0, %v198
    %200 = vmatmul.bf16.gmra.mxu0 %v100
    %v201 = vpop.f32.mrf.mxu0
    %v202 = vadd.f32 0.0, %v201
    %v203 = vpop.f32.mrf.mxu0
    %v204 = vadd.f32 0.0, %v203
    %205 = vmatmul.bf16.gmra.mxu0 %v101
    %v206 = vpop.f32.mrf.mxu0
    %v207 = vadd.f32 0.0, %v206
    %v208 = vpop.f32.mrf.mxu0
    %v209 = vadd.f32 0.0, %v208
    %210 = vmatmul.bf16.gmra.mxu0 %v102
    %v211 = vpop.f32.mrf.mxu0
    %v212 = vadd.f32 0.0, %v211
    %v213 = vpop.f32.mrf.mxu0
    %v214 = vadd.f32 0.0, %v213
    %215 = vdwg.mxu0
    %v216 = vadd.f32 %v103, %v177
    %v217 = vadd.f32 %v104, %v179
    %v218 = vadd.f32 %v105, %v182
    %v219 = vadd.f32 %v106, %v184
    %v220 = vadd.f32 %v107, %v187
    %v221 = vadd.f32 %v108, %v189
    %v222 = vadd.f32 %v109, %v192
    %v223 = vadd.f32 %v110, %v194
    %v224 = vadd.f32 %v111, %v197
    %v225 = vadd.f32 %v112, %v199
    %v226 = vadd.f32 %v113, %v202
    %v227 = vadd.f32 %v114, %v204
    %v228 = vadd.f32 %v115, %v207
    %v229 = vadd.f32 %v116, %v209
    %v230 = vadd.f32 %v117, %v212
    %v231 = vadd.f32 %v118, %v214
    %232 = vst [vmem:[#allocation2] sm:$0xff] %v216
    %233 = vst [vmem:[#allocation2 + $0x8] sm:$0xff] %v217
    %234 = vst [vmem:[#allocation2 + $0x10] sm:$0xff] %v218
    %235 = vst [vmem:[#allocation2 + $0x18] sm:$0xff] %v219
    %236 = vst [vmem:[#allocation2 + $0x20] sm:$0xff] %v220
    %237 = vst [vmem:[#allocation2 + $0x28] sm:$0xff] %v221
    %238 = vst [vmem:[#allocation2 + $0x30] sm:$0xff] %v222
    %239 = vst [vmem:[#allocation2 + $0x38] sm:$0xff] %v223
    %240 = vst [vmem:[#allocation2 + $0x40] sm:$0xff] %v224
    %241 = vst [vmem:[#allocation2 + $0x48] sm:$0xff] %v225
    %242 = vst [vmem:[#allocation2 + $0x50] sm:$0xff] %v226
    %243 = vst [vmem:[#allocation2 + $0x58] sm:$0xff] %v227
    %244 = vst [vmem:[#allocation2 + $0x60] sm:$0xff] %v228
    %245 = vst [vmem:[#allocation2 + $0x68] sm:$0xff] %v229
    %246 = vst [vmem:[#allocation2 + $0x70] sm:$0xff] %v230
    %247 = vst [vmem:[#allocation2 + $0x78] sm:$0xff] %v231
    // Predicated region
    $region22: #{tpu_custom_call.1} parent=1 // pred_check
      %p248 = pneg %p18
    $region23: #{tpu_custom_call.1} parent=1 // pred_check_branch
      %250 = sbr.rel (%p248) target = $region25
    $region24: #{tpu_custom_call.1} parent=1 // pred_region
      %v251 = vld [vmem:[#allocation2] sm:$0xff]
      %v252 = vld [vmem:[#allocation2 + $0x8] sm:$0xff]
      %v253 = vld [vmem:[#allocation2 + $0x10] sm:$0xff]
      %v254 = vld [vmem:[#allocation2 + $0x18] sm:$0xff]
      %v255 = vld [vmem:[#allocation2 + $0x20] sm:$0xff]
      %v256 = vld [vmem:[#allocation2 + $0x28] sm:$0xff]
      %v257 = vld [vmem:[#allocation2 + $0x30] sm:$0xff]
      %v258 = vld [vmem:[#allocation2 + $0x38] sm:$0xff]
      %v259 = vld [vmem:[#allocation2 + $0x40] sm:$0xff]
      %v260 = vld [vmem:[#allocation2 + $0x48] sm:$0xff]
      %v261 = vld [vmem:[#allocation2 + $0x50] sm:$0xff]
      %v262 = vld [vmem:[#allocation2 + $0x58] sm:$0xff]
      %v263 = vld [vmem:[#allocation2 + $0x60] sm:$0xff]
      %v264 = vld [vmem:[#allocation2 + $0x68] sm:$0xff]
      %v265 = vld [vmem:[#allocation2 + $0x70] sm:$0xff]
      %v266 = vld [vmem:[#allocation2 + $0x78] sm:$0xff]
      %v267 = vld [vmem:[%s2] sm:$0xff]
      %v268 = vld [vmem:[%s2 + $0x8] sm:$0xff]
      %v269 = vld [vmem:[%s2 + $0x10] sm:$0xff]
      %v270 = vld [vmem:[%s2 + $0x18] sm:$0xff]
      %v271 = vld [vmem:[%s2 + $0x20] sm:$0xff]
      %v272 = vld [vmem:[%s2 + $0x28] sm:$0xff]
      %v273 = vld [vmem:[%s2 + $0x30] sm:$0xff]
      %v274 = vld [vmem:[%s2 + $0x38] sm:$0xff]
      %v275 = vld [vmem:[%s2 + $0x40] sm:$0xff]
      %v276 = vld [vmem:[%s2 + $0x48] sm:$0xff]
      %v277 = vld [vmem:[%s2 + $0x50] sm:$0xff]
      %v278 = vld [vmem:[%s2 + $0x58] sm:$0xff]
      %v279 = vld [vmem:[%s2 + $0x60] sm:$0xff]
      %v280 = vld [vmem:[%s2 + $0x68] sm:$0xff]
      %v281 = vld [vmem:[%s2 + $0x70] sm:$0xff]
      %v282 = vld [vmem:[%s2 + $0x78] sm:$0xff]
      %284 = vset.pattern.permute.xlu0 0
      %285 = vperm.xlu0 %284, %v267
      %v286 = vpop.permute.xlu0 %285
      %289 = vset.pattern.permute.xlu0 0
      %290 = vperm.xlu0 %289, %v268
      %v291 = vpop.permute.xlu0 %290
      %294 = vset.pattern.permute.xlu0 0
      %295 = vperm.xlu0 %294, %v269
      %v296 = vpop.permute.xlu0 %295
      %299 = vset.pattern.permute.xlu0 0
      %300 = vperm.xlu0 %299, %v270
      %v301 = vpop.permute.xlu0 %300
      %304 = vset.pattern.permute.xlu0 0
      %305 = vperm.xlu0 %304, %v271
      %v306 = vpop.permute.xlu0 %305
      %309 = vset.pattern.permute.xlu0 0
      %310 = vperm.xlu0 %309, %v272
      %v311 = vpop.permute.xlu0 %310
      %314 = vset.pattern.permute.xlu0 0
      %315 = vperm.xlu0 %314, %v273
      %v316 = vpop.permute.xlu0 %315
      %319 = vset.pattern.permute.xlu0 0
      %320 = vperm.xlu0 %319, %v274
      %v321 = vpop.permute.xlu0 %320
      %324 = vset.pattern.permute.xlu0 0
      %325 = vperm.xlu0 %324, %v275
      %v326 = vpop.permute.xlu0 %325
      %329 = vset.pattern.permute.xlu0 0
      %330 = vperm.xlu0 %329, %v276
      %v331 = vpop.permute.xlu0 %330
      %334 = vset.pattern.permute.xlu0 0
      %335 = vperm.xlu0 %334, %v277
      %v336 = vpop.permute.xlu0 %335
      %339 = vset.pattern.permute.xlu0 0
      %340 = vperm.xlu0 %339, %v278
      %v341 = vpop.permute.xlu0 %340
      %344 = vset.pattern.permute.xlu0 0
      %345 = vperm.xlu0 %344, %v279
      %v346 = vpop.permute.xlu0 %345
      %349 = vset.pattern.permute.xlu0 0
      %350 = vperm.xlu0 %349, %v280
      %v351 = vpop.permute.xlu0 %350
      %354 = vset.pattern.permute.xlu0 0
      %355 = vperm.xlu0 %354, %v281
      %v356 = vpop.permute.xlu0 %355
      %359 = vset.pattern.permute.xlu0 0
      %360 = vperm.xlu0 %359, %v282
      %v361 = vpop.permute.xlu0 %360
      %v363 = vmul.f32 %v251, %v286
      %v364 = vmul.f32 %v252, %v291
      %v365 = vmul.f32 %v253, %v296
      %v366 = vmul.f32 %v254, %v301
      %v367 = vmul.f32 %v255, %v306
      %v368 = vmul.f32 %v256, %v311
      %v369 = vmul.f32 %v257, %v316
      %v370 = vmul.f32 %v258, %v321
      %v371 = vmul.f32 %v259, %v326
      %v372 = vmul.f32 %v260, %v331
      %v373 = vmul.f32 %v261, %v336
      %v374 = vmul.f32 %v262, %v341
      %v375 = vmul.f32 %v263, %v346
      %v376 = vmul.f32 %v264, %v351
      %v377 = vmul.f32 %v265, %v356
      %v378 = vmul.f32 %v266, %v361
      %v379 = vld [vmem:[%s3] sm:$0x1]
      %v381 = vperm.slane %v379, 0
      %v383 = vadd.f32 %v363, %v381
      %v384 = vadd.f32 %v364, %v381
      %v385 = vadd.f32 %v365, %v381
      %v386 = vadd.f32 %v366, %v381
      %v387 = vadd.f32 %v367, %v381
      %v388 = vadd.f32 %v368, %v381
      %v389 = vadd.f32 %v369, %v381
      %v390 = vadd.f32 %v370, %v381
      %v391 = vadd.f32 %v371, %v381
      %v392 = vadd.f32 %v372, %v381
      %v393 = vadd.f32 %v373, %v381
      %v394 = vadd.f32 %v374, %v381
      %v395 = vadd.f32 %v375, %v381
      %v396 = vadd.f32 %v376, %v381
      %v397 = vadd.f32 %v377, %v381
      %v398 = vadd.f32 %v378, %v381
      %v399 = vmax.f32 %v383, 0.0
      %v400 = vmax.f32 %v384, 0.0
      %v401 = vmax.f32 %v385, 0.0
      %v402 = vmax.f32 %v386, 0.0
      %v403 = vmax.f32 %v387, 0.0
      %v404 = vmax.f32 %v388, 0.0
      %v405 = vmax.f32 %v389, 0.0
      %v406 = vmax.f32 %v390, 0.0
      %v407 = vmax.f32 %v391, 0.0
      %v408 = vmax.f32 %v392, 0.0
      %v409 = vmax.f32 %v393, 0.0
      %v410 = vmax.f32 %v394, 0.0
      %v411 = vmax.f32 %v395, 0.0
      %v412 = vmax.f32 %v396, 0.0
      %v413 = vmax.f32 %v397, 0.0
      %v414 = vmax.f32 %v398, 0.0
      %415 = vst [vmem:[#allocation3] sm:$0xff] %v399
      %416 = vst [vmem:[#allocation3 + $0x8] sm:$0xff] %v400
      %417 = vst [vmem:[#allocation3 + $0x10] sm:$0xff] %v401
      %418 = vst [vmem:[#allocation3 + $0x18] sm:$0xff] %v402
      %419 = vst [vmem:[#allocation3 + $0x20] sm:$0xff] %v403
      %420 = vst [vmem:[#allocation3 + $0x28] sm:$0xff] %v404
      %421 = vst [vmem:[#allocation3 + $0x30] sm:$0xff] %v405
      %422 = vst [vmem:[#allocation3 + $0x38] sm:$0xff] %v406
      %423 = vst [vmem:[#allocation3 + $0x40] sm:$0xff] %v407
      %424 = vst [vmem:[#allocation3 + $0x48] sm:$0xff] %v408
      %425 = vst [vmem:[#allocation3 + $0x50] sm:$0xff] %v409
      %426 = vst [vmem:[#allocation3 + $0x58] sm:$0xff] %v410
      %427 = vst [vmem:[#allocation3 + $0x60] sm:$0xff] %v411
      %428 = vst [vmem:[#allocation3 + $0x68] sm:$0xff] %v412
      %429 = vst [vmem:[#allocation3 + $0x70] sm:$0xff] %v413
      %430 = vst [vmem:[#allocation3 + $0x78] sm:$0xff] %v414
    $region25: #{tpu_custom_call.1} parent=1 // pred_fallthru
      _
    // Predicated region
    $region26: #{tpu_custom_call.1} parent=1 // pred_check
      _
    $region27: #{tpu_custom_call.1} parent=1 // pred_check_branch
      %432 = sbr.rel (0) target = $region29
    $region28: #{tpu_custom_call.1} parent=1 // pred_region
      %434 = vsyncadd [#allocation4], 0
      %s435 = sshll.u32 [#allocation3], 4
      %s436 = int_to_ptr.vmem [resolvable:$true] %s435
      %s437 = sshll.u32 %s4, 4
      %s438 = int_to_ptr.hbm [resolvable:$true] %s437
      %443 = dma.vmem_to_hbm [thread:$0]  %s436, 2048, %s438, [#allocation4], 128, 128, 8
    $region29: #{tpu_custom_call.1} parent=1 // pred_fallthru
      _
    // Predicated region
    $region30: #{tpu_custom_call.1} parent=1 // pred_check
      _
    $region31: #{tpu_custom_call.1} parent=1 // pred_check_branch
      %445 = sbr.rel (0) target = $region33
    $region32: #{tpu_custom_call.1} parent=1 // pred_region
      %447 = dma.done [#allocation4], 2048
    $region33: #{tpu_custom_call.1} parent=1 // pred_fallthru
      _
    %448 = vsyncpa [#allocation4], 1

</llo_original>
